<compile_context>
chip_gen: v6e
topology: v6e:2x2x1
jax: 0.10.0
libtpu: 0.0.40
codegen_flags: <defaults>
</compile_context>

<pallas_src>
import jax
import jax.numpy as jnp
from jax.experimental import pallas as pl
from jax.experimental.pallas import tpu as pltpu

PREEMPH = 0.97
MIX_PROB = 0.8
BETA_A = 0.25
BETA_B = 0.25
LANES = 512          # last-dim tile width (multiple of 128 -> unmasked stores)


# ----------------------------- Pallas kernel ---------------------------
def _make_kernel(items_per_block):
    bb = items_per_block

    def mixup_kernel(alpha_ref, flag_ref, sig_ref, x_ref, out_ref):
        # alpha_ref, flag_ref: SMEM (B,) scalars.
        # sig_ref, x_ref, out_ref: VMEM (bb, R, LANES) f32 blocks.
        base = pl.program_id(0) * bb

        for i in range(bb):                       # static per-item loop
            b = base + i
            a = alpha_ref[b]                      # beta(a,b) mixing coefficient
            f = flag_ref[b]                       # 1 -> mix, 0 -> passthrough

            def mix_branch(i=i, a=a):
                x = x_ref[i]                      # (R, LANES) mix partner
                sig = sig_ref[i]                  # (R, LANES) original signal
                rows, lanes = x.shape

                # -- preemphasis: prev sample of flat index r*L+c is (r, c-1)
                #    for c > 0 and (r-1, L-1) for c == 0; x[-1] := 0.
                lane_prev = pltpu.roll(x, shift=1, axis=1)        # (r,c)<-x[r,c-1 mod L]
                row_prev = pltpu.roll(lane_prev, shift=1, axis=0)  # (r,0)<-x[r-1,L-1]
                col = jax.lax.broadcasted_iota(jnp.int32, (rows, lanes), 1)
                not_row0 = (jax.lax.broadcasted_iota(jnp.int32, (rows, 1), 0)
                            > 0).astype(x.dtype)                   # tiny (R,1) mask
                prev = jnp.where(col == 0, row_prev * not_row0, lane_prev)
                x_pre = jnp.clip(x - PREEMPH * prev, -1.0, 1.0)    # lfilter clamp=True

                # -- mix --
                mixed = a * sig + (1.0 - a) * x_pre

                # -- abs-max normalization: mixed / clamp(max|mixed|, min=1.0)
                # NOTE: no padded-tail mask is needed. If the wrapper had to
                # zero-pad, padded samples of |mixed| are <= (1-a)*0.97 < 1.0,
                # and the denominator is clamped at 1.0, so padding can never
                # change the normalization of the valid region.
                abs_max = jnp.max(jnp.abs(mixed), axis=1, keepdims=True)  # (R,1)
                abs_max = jnp.max(abs_max, axis=0, keepdims=True)         # (1,1)
                inv = pl.reciprocal(jnp.maximum(abs_max, 1.0), approx=True)
                out_ref[i] = mixed * inv

            def pass_branch(i=i):
                # reference early-return: un-mixed items are returned as-is
                # (and are NOT abs-max normalized).
                out_ref[i] = sig_ref[i]

            pl.when(f != 0)(mix_branch)
            pl.when(f == 0)(pass_branch)

    return mixup_kernel


# ------------------------------- wrapper --------------------------------
def _items_per_block(batch, rows, lanes, itemsize=4, target_bytes=1 << 20):
    """Items per grid step: ~1 MiB input blocks, but keep >=2 grid steps
    (v7x has 2 TensorCores) and an evenly dividing block count."""
    per_item = rows * lanes * itemsize
    bb = max(1, min(batch, target_bytes // max(per_item, 1)))
    if batch >= 2:
        bb = min(bb, max(1, batch // 2))
    while batch % bb:
        bb -= 1
    return bb


def mixup_batch(signal, x, alpha, mix_flag, *, lanes=LANES):
    """signal, x: (B, T) f32; alpha: (B,) f32; mix_flag: (B,) bool/int.
    Returns (B, T): per-item  abs-max-normalize(alpha*signal + (1-alpha)*preemph(x))
    where mix_flag is set, and the untouched signal where it is not."""
    B, T = signal.shape

    Tp = lanes * ((T + lanes - 1) // lanes)
    if Tp != T:
        # Fallback only: feed lane-aligned T (multiple of 512) to stay on the
        # copy-free path.  Zero padding is provably harmless (see kernel note).
        signal = jnp.pad(signal, ((0, 0), (0, Tp - T)))
        x = jnp.pad(x, ((0, 0), (0, Tp - T)))
    R = Tp // lanes

    # Free reshape (splits the contiguous minor dim) -> lane-dense layout.
    sig3 = signal.reshape(B, R, lanes)
    x3 = x.reshape(B, R, lanes)

    bb = _items_per_block(B, R, lanes)
    grid = (B // bb,)

    # VMEM budget: 2 inputs + 1 output double-buffered + ~8 per-item temps.
    block_bytes = bb * R * lanes * 4
    tile_bytes = R * lanes * 4
    vmem_needed = 6 * block_bytes + 8 * tile_bytes + (1 << 20)
    vmem_limit = int(min(max(2 * vmem_needed, 8 << 20), 40 << 20))

    out = pl.pallas_call(
        _make_kernel(bb),
        grid=grid,
        in_specs=[
            pl.BlockSpec(memory_space=pltpu.MemorySpace.SMEM),       # alpha (B,)
            pl.BlockSpec(memory_space=pltpu.MemorySpace.SMEM),       # flags (B,)
            pl.BlockSpec((bb, R, lanes), lambda g: (g, 0, 0)),       # signal
            pl.BlockSpec((bb, R, lanes), lambda g: (g, 0, 0)),       # partner
        ],
        out_specs=pl.BlockSpec((bb, R, lanes), lambda g: (g, 0, 0)),
        out_shape=jax.ShapeDtypeStruct((B, R, lanes), jnp.float32),
        compiler_params=pltpu.CompilerParams(
            dimension_semantics=("parallel",),
            vmem_limit_bytes=vmem_limit),
    )(alpha.astype(jnp.float32), mix_flag.astype(jnp.int32), sig3, x3)

    out = out.reshape(B, Tp)
    if Tp != T:
        out = out[:, :T]
    return out


def mixup_forward(signal, x, alpha, mix_flag, result, age, gender,
                  contrastive=False):
    """Batched MixUp.forward. mix_flag[b] == (rand() < mix_prob) per item."""
    out_signal = mixup_batch(signal, x, alpha, mix_flag)

    # Label "mixing" follows the reference exactly: each item's labels are
    # mixed with themselves (alpha*v + (1-alpha)*v) then clipped, only on
    # mixed items.  (Faithful to the spec even though it is a self-mix.)
    mixed_age = jnp.clip(alpha * age + (1.0 - alpha) * age, 0.0, 1.0)
    mixed_gender = jnp.clip(alpha * gender + (1.0 - alpha) * gender, 0.0, 1.0)
    out_age = jnp.where(mix_flag, mixed_age, age)
    out_gender = jnp.where(mix_flag, mixed_gender, gender)
    if contrastive:
        out_result = result
    else:
        mixed_result = jnp.clip(alpha * result + (1.0 - alpha) * result, 0.0, 1.0)
        out_result = jnp.where(mix_flag, mixed_result, result)

    return out_signal, out_age, out_gender, out_result


# --------------------------- pure-JAX reference --------------------------
def mixup_reference(signal, x, alpha, mix_flag):
    B, T = signal.shape
    prev = jnp.concatenate([jnp.zeros((B, 1), x.dtype), x[:, :-1]], axis=1)
    x_pre = jnp.clip(x - PREEMPH * prev, -1.0, 1.0)
    a = alpha[:, None]
    mixed = a * signal + (1.0 - a) * x_pre
    denom = jnp.maximum(jnp.max(jnp.abs(mixed), axis=1, keepdims=True), 1.0)
    return jnp.where(mix_flag[:, None], mixed / denom, signal)


if __name__ == "__main__":
    key = jax.random.PRNGKey(0)
    k1, k2, k3, k4, k5, k6, k7 = jax.random.split(key, 7)
    B, T = 4, 4096                     # 4 utterances, ~0.5 s @ 8 kHz, lane-aligned

    signal = jax.random.uniform(k1, (B, T), jnp.float32, -1.0, 1.0)
    # mix partner: stands in for torchaudio.load + resampling + crop (see TODOs)
    x_mix = jax.random.uniform(k2, (B, T), jnp.float32, -1.0, 1.0)
    alpha = jax.random.beta(k3, BETA_A, BETA_B, (B,)).astype(jnp.float32)
    mix_flag = jax.random.uniform(k4, (B,)) < MIX_PROB
    result = jax.random.bernoulli(k5, 0.5, (B,)).astype(jnp.float32)
    age = jax.random.bernoulli(k6, 0.5, (B,)).astype(jnp.float32)
    gender = jax.random.bernoulli(k7, 0.5, (B,)).astype(jnp.float32)

    fwd = jax.jit(mixup_forward, static_argnames=("contrastive",))
    out_signal, out_age, out_gender, out_result = fwd(
        signal, x_mix, alpha, mix_flag, result, age, gender, contrastive=False)
    jax.block_until_ready((out_signal, out_age, out_gender, out_result))

    # correctness check against a pure-JAX reference (approx reciprocal -> 5e-3)
    ref = mixup_reference(signal, x_mix, alpha, mix_flag)
    max_err = float(jnp.max(jnp.abs(out_signal - ref)))

    assert out_signal.shape == (B, T)
    assert out_age.shape == (B,) and out_gender.shape == (B,)
    assert out_result.shape == (B,)
    assert bool(jnp.all(jnp.isfinite(out_signal)))
    assert max_err < 5e-3, f"mismatch vs reference: {max_err}"
    print("KERNEL_OK")
</pallas_src>

<mosaic_0001>
module attributes {stable_mosaic.version = 11 : i64} {
  func.func @mixup_kernel(%arg0: i32, %arg1: memref<4xf32, #tpu.memory_space<smem>>, %arg2: memref<4xi32, #tpu.memory_space<smem>>, %arg3: memref<2x8x512xf32, #tpu.memory_space<vmem>>, %arg4: memref<2x8x512xf32, #tpu.memory_space<vmem>>, %arg5: memref<2x8x512xf32, #tpu.memory_space<vmem>>) attributes {dimension_semantics = [#tpu.dimension_semantics<parallel>], iteration_bounds = array<i64: 2>, scalar_prefetch = 0 : i64, scratch_operands = 0 : i64, tpu.core_type = #tpu.core_type<tc>, window_params = [{transform_indices = @transform_0, window_bounds = array<i64: 4>}, {transform_indices = @transform_1, window_bounds = array<i64: 4>}, {transform_indices = @transform_2, window_bounds = array<i64: 2, 8, 512>}, {transform_indices = @transform_3, window_bounds = array<i64: 2, 8, 512>}, {transform_indices = @transform_4, window_bounds = array<i64: 2, 8, 512>}]} {
    %c2_i32 = arith.constant 2 : i32
    %0 = arith.muli %arg0, %c2_i32 : i32
    %c0_i32 = arith.constant 0 : i32
    %1 = arith.addi %0, %c0_i32 : i32
    %2 = arith.index_cast %1 : i32 to index
    %3 = memref.load %arg1[%2] : memref<4xf32, #tpu.memory_space<smem>>
    %4 = arith.index_cast %1 : i32 to index
    %5 = memref.load %arg2[%4] : memref<4xi32, #tpu.memory_space<smem>>
    %c0_i32_0 = arith.constant 0 : i32
    %6 = arith.cmpi ne, %5, %c0_i32_0 : i32
    %7 = arith.extui %6 : i1 to i32
    %c0_i32_1 = arith.constant 0 : i32
    %8 = arith.cmpi ne, %7, %c0_i32_1 : i32
    scf.if %8 {
      %c0 = arith.constant 0 : index
      %c0_8 = arith.constant 0 : index
      %c0_9 = arith.constant 0 : index
      %23 = vector.load %arg4[%c0, %c0_8, %c0_9] : memref<2x8x512xf32, #tpu.memory_space<vmem>>, vector<1x8x512xf32>
      %24 = vector.shape_cast %23 : vector<1x8x512xf32> to vector<8x512xf32>
      %c0_10 = arith.constant 0 : index
      %c0_11 = arith.constant 0 : index
      %c0_12 = arith.constant 0 : index
      %25 = vector.load %arg3[%c0_10, %c0_11, %c0_12] : memref<2x8x512xf32, #tpu.memory_space<vmem>>, vector<1x8x512xf32>
      %26 = vector.shape_cast %25 : vector<1x8x512xf32> to vector<8x512xf32>
      %c1_i32_13 = arith.constant 1 : i32
      %27 = tpu.dynamic_rotate %24 by %c1_i32_13 dim 1 : vector<8x512xf32>, i32 -> vector<8x512xf32>
      %c1_i32_14 = arith.constant 1 : i32
      %28 = tpu.dynamic_rotate %27 by %c1_i32_14 dim 0 : vector<8x512xf32>, i32 -> vector<8x512xf32>
      %29 = tpu.iota {dimensions = array<i32: 1>} : vector<8x512xi32>
      %30 = tpu.iota {dimensions = array<i32: 0>} : vector<8x1xi32>
      %c0_i32_15 = arith.constant 0 : i32
      %31 = vector.broadcast %c0_i32_15 : i32 to vector<8x1xi32>
      %32 = arith.cmpi sgt, %30, %31 : vector<8x1xi32>
      %33 = arith.extui %32 : vector<8x1xi1> to vector<8x1xi32>
      %34 = arith.sitofp %33 : vector<8x1xi32> to vector<8x1xf32>
      %c0_i32_16 = arith.constant 0 : i32
      %35 = vector.broadcast %c0_i32_16 : i32 to vector<8x512xi32>
      %36 = arith.cmpi eq, %29, %35 : vector<8x512xi32>
      %37 = vector.broadcast %34 : vector<8x1xf32> to vector<8x512xf32>
      %38 = arith.mulf %28, %37 : vector<8x512xf32>
      %39 = arith.select %36, %38, %27 : vector<8x512xi1>, vector<8x512xf32>
      %cst = arith.constant 9.700000e-01 : f32
      %40 = vector.broadcast %cst : f32 to vector<8x512xf32>
      %41 = arith.mulf %40, %39 : vector<8x512xf32>
      %42 = arith.subf %24, %41 : vector<8x512xf32>
      %cst_17 = arith.constant -1.000000e+00 : f32
      %cst_18 = arith.constant 1.000000e+00 : f32
      %43 = vector.broadcast %cst_17 : f32 to vector<8x512xf32>
      %44 = arith.maximumf %43, %42 : vector<8x512xf32>
      %45 = vector.broadcast %cst_18 : f32 to vector<8x512xf32>
      %46 = arith.minimumf %45, %44 : vector<8x512xf32>
      %47 = vector.broadcast %3 : f32 to vector<8x512xf32>
      %48 = arith.mulf %47, %26 : vector<8x512xf32>
      %cst_19 = arith.constant 1.000000e+00 : f32
      %49 = arith.subf %cst_19, %3 : f32
      %50 = vector.broadcast %49 : f32 to vector<8x512xf32>
      %51 = arith.mulf %50, %46 : vector<8x512xf32>
      %52 = arith.addf %48, %51 : vector<8x512xf32>
      %53 = math.absf %52 : vector<8x512xf32>
      %cst_20 = arith.constant dense<0xFF800000> : vector<8xf32>
      %54 = vector.multi_reduction <maximumf>, %53, %cst_20 [1] : vector<8x512xf32> to vector<8xf32>
      %55 = vector.shape_cast %54 : vector<8xf32> to vector<8x1xf32>
      %cst_21 = arith.constant dense<0xFF800000> : vector<1xf32>
      %56 = vector.multi_reduction <maximumf>, %55, %cst_21 [0] : vector<8x1xf32> to vector<1xf32>
      %57 = vector.shape_cast %56 : vector<1xf32> to vector<1x1xf32>
      %cst_22 = arith.constant 1.000000e+00 : f32
      %58 = vector.broadcast %cst_22 : f32 to vector<1x1xf32>
      %59 = arith.maximumf %57, %58 : vector<1x1xf32>
      %60 = tpu.reciprocal %59 {approx = true} : vector<1x1xf32> -> vector<1x1xf32>
      %61 = vector.broadcast %60 : vector<1x1xf32> to vector<8x512xf32>
      %62 = arith.mulf %52, %61 : vector<8x512xf32>
      %c0_23 = arith.constant 0 : index
      %c0_24 = arith.constant 0 : index
      %c0_25 = arith.constant 0 : index
      %63 = vector.load %arg5[%c0_23, %c0_24, %c0_25] : memref<2x8x512xf32, #tpu.memory_space<vmem>>, vector<1x8x512xf32>
      %64 = vector.shape_cast %63 : vector<1x8x512xf32> to vector<8x512xf32>
      %65 = vector.shape_cast %62 : vector<8x512xf32> to vector<1x8x512xf32>
      tpu.vector_store %arg5[%c0_23, %c0_24, %c0_25], %65 {strides = array<i32>} : memref<2x8x512xf32, #tpu.memory_space<vmem>>, vector<1x8x512xf32>,
    } else {
    }
    %c0_i32_2 = arith.constant 0 : i32
    %9 = arith.cmpi eq, %5, %c0_i32_2 : i32
    %10 = arith.extui %9 : i1 to i32
    %c0_i32_3 = arith.constant 0 : i32
    %11 = arith.cmpi ne, %10, %c0_i32_3 : i32
    scf.if %11 {
      %c0 = arith.constant 0 : index
      %c0_8 = arith.constant 0 : index
      %c0_9 = arith.constant 0 : index
      %23 = vector.load %arg3[%c0, %c0_8, %c0_9] : memref<2x8x512xf32, #tpu.memory_space<vmem>>, vector<1x8x512xf32>
      %24 = vector.shape_cast %23 : vector<1x8x512xf32> to vector<8x512xf32>
      %c0_10 = arith.constant 0 : index
      %c0_11 = arith.constant 0 : index
      %c0_12 = arith.constant 0 : index
      %25 = vector.load %arg5[%c0_10, %c0_11, %c0_12] : memref<2x8x512xf32, #tpu.memory_space<vmem>>, vector<1x8x512xf32>
      %26 = vector.shape_cast %25 : vector<1x8x512xf32> to vector<8x512xf32>
      %27 = vector.shape_cast %24 : vector<8x512xf32> to vector<1x8x512xf32>
      tpu.vector_store %arg5[%c0_10, %c0_11, %c0_12], %27 {strides = array<i32>} : memref<2x8x512xf32, #tpu.memory_space<vmem>>, vector<1x8x512xf32>,
    } else {
    }
    %c1_i32 = arith.constant 1 : i32
    %12 = arith.addi %0, %c1_i32 : i32
    %13 = arith.index_cast %12 : i32 to index
    %14 = memref.load %arg1[%13] : memref<4xf32, #tpu.memory_space<smem>>
    %15 = arith.index_cast %12 : i32 to index
    %16 = memref.load %arg2[%15] : memref<4xi32, #tpu.memory_space<smem>>
    %c0_i32_4 = arith.constant 0 : i32
    %17 = arith.cmpi ne, %16, %c0_i32_4 : i32
    %18 = arith.extui %17 : i1 to i32
    %c0_i32_5 = arith.constant 0 : i32
    %19 = arith.cmpi ne, %18, %c0_i32_5 : i32
    scf.if %19 {
      %c1 = arith.constant 1 : index
      %c0 = arith.constant 0 : index
      %c0_8 = arith.constant 0 : index
      %23 = vector.load %arg4[%c1, %c0, %c0_8] : memref<2x8x512xf32, #tpu.memory_space<vmem>>, vector<1x8x512xf32>
      %24 = vector.shape_cast %23 : vector<1x8x512xf32> to vector<8x512xf32>
      %c1_9 = arith.constant 1 : index
      %c0_10 = arith.constant 0 : index
      %c0_11 = arith.constant 0 : index
      %25 = vector.load %arg3[%c1_9, %c0_10, %c0_11] : memref<2x8x512xf32, #tpu.memory_space<vmem>>, vector<1x8x512xf32>
      %26 = vector.shape_cast %25 : vector<1x8x512xf32> to vector<8x512xf32>
      %c1_i32_12 = arith.constant 1 : i32
      %27 = tpu.dynamic_rotate %24 by %c1_i32_12 dim 1 : vector<8x512xf32>, i32 -> vector<8x512xf32>
      %c1_i32_13 = arith.constant 1 : i32
      %28 = tpu.dynamic_rotate %27 by %c1_i32_13 dim 0 : vector<8x512xf32>, i32 -> vector<8x512xf32>
      %29 = tpu.iota {dimensions = array<i32: 1>} : vector<8x512xi32>
      %30 = tpu.iota {dimensions = array<i32: 0>} : vector<8x1xi32>
      %c0_i32_14 = arith.constant 0 : i32
      %31 = vector.broadcast %c0_i32_14 : i32 to vector<8x1xi32>
      %32 = arith.cmpi sgt, %30, %31 : vector<8x1xi32>
      %33 = arith.extui %32 : vector<8x1xi1> to vector<8x1xi32>
      %34 = arith.sitofp %33 : vector<8x1xi32> to vector<8x1xf32>
      %c0_i32_15 = arith.constant 0 : i32
      %35 = vector.broadcast %c0_i32_15 : i32 to vector<8x512xi32>
      %36 = arith.cmpi eq, %29, %35 : vector<8x512xi32>
      %37 = vector.broadcast %34 : vector<8x1xf32> to vector<8x512xf32>
      %38 = arith.mulf %28, %37 : vector<8x512xf32>
      %39 = arith.select %36, %38, %27 : vector<8x512xi1>, vector<8x512xf32>
      %cst = arith.constant 9.700000e-01 : f32
      %40 = vector.broadcast %cst : f32 to vector<8x512xf32>
      %41 = arith.mulf %40, %39 : vector<8x512xf32>
      %42 = arith.subf %24, %41 : vector<8x512xf32>
      %cst_16 = arith.constant -1.000000e+00 : f32
      %cst_17 = arith.constant 1.000000e+00 : f32
      %43 = vector.broadcast %cst_16 : f32 to vector<8x512xf32>
      %44 = arith.maximumf %43, %42 : vector<8x512xf32>
      %45 = vector.broadcast %cst_17 : f32 to vector<8x512xf32>
      %46 = arith.minimumf %45, %44 : vector<8x512xf32>
      %47 = vector.broadcast %14 : f32 to vector<8x512xf32>
      %48 = arith.mulf %47, %26 : vector<8x512xf32>
      %cst_18 = arith.constant 1.000000e+00 : f32
      %49 = arith.subf %cst_18, %14 : f32
      %50 = vector.broadcast %49 : f32 to vector<8x512xf32>
      %51 = arith.mulf %50, %46 : vector<8x512xf32>
      %52 = arith.addf %48, %51 : vector<8x512xf32>
      %53 = math.absf %52 : vector<8x512xf32>
      %cst_19 = arith.constant dense<0xFF800000> : vector<8xf32>
      %54 = vector.multi_reduction <maximumf>, %53, %cst_19 [1] : vector<8x512xf32> to vector<8xf32>
      %55 = vector.shape_cast %54 : vector<8xf32> to vector<8x1xf32>
      %cst_20 = arith.constant dense<0xFF800000> : vector<1xf32>
      %56 = vector.multi_reduction <maximumf>, %55, %cst_20 [0] : vector<8x1xf32> to vector<1xf32>
      %57 = vector.shape_cast %56 : vector<1xf32> to vector<1x1xf32>
      %cst_21 = arith.constant 1.000000e+00 : f32
      %58 = vector.broadcast %cst_21 : f32 to vector<1x1xf32>
      %59 = arith.maximumf %57, %58 : vector<1x1xf32>
      %60 = tpu.reciprocal %59 {approx = true} : vector<1x1xf32> -> vector<1x1xf32>
      %61 = vector.broadcast %60 : vector<1x1xf32> to vector<8x512xf32>
      %62 = arith.mulf %52, %61 : vector<8x512xf32>
      %c1_22 = arith.constant 1 : index
      %c0_23 = arith.constant 0 : index
      %c0_24 = arith.constant 0 : index
      %63 = vector.load %arg5[%c1_22, %c0_23, %c0_24] : memref<2x8x512xf32, #tpu.memory_space<vmem>>, vector<1x8x512xf32>
      %64 = vector.shape_cast %63 : vector<1x8x512xf32> to vector<8x512xf32>
      %65 = vector.shape_cast %62 : vector<8x512xf32> to vector<1x8x512xf32>
      tpu.vector_store %arg5[%c1_22, %c0_23, %c0_24], %65 {strides = array<i32>} : memref<2x8x512xf32, #tpu.memory_space<vmem>>, vector<1x8x512xf32>,
    } else {
    }
    %c0_i32_6 = arith.constant 0 : i32
    %20 = arith.cmpi eq, %16, %c0_i32_6 : i32
    %21 = arith.extui %20 : i1 to i32
    %c0_i32_7 = arith.constant 0 : i32
    %22 = arith.cmpi ne, %21, %c0_i32_7 : i32
    scf.if %22 {
      %c1 = arith.constant 1 : index
      %c0 = arith.constant 0 : index
      %c0_8 = arith.constant 0 : index
      %23 = vector.load %arg3[%c1, %c0, %c0_8] : memref<2x8x512xf32, #tpu.memory_space<vmem>>, vector<1x8x512xf32>
      %24 = vector.shape_cast %23 : vector<1x8x512xf32> to vector<8x512xf32>
      %c1_9 = arith.constant 1 : index
      %c0_10 = arith.constant 0 : index
      %c0_11 = arith.constant 0 : index
      %25 = vector.load %arg5[%c1_9, %c0_10, %c0_11] : memref<2x8x512xf32, #tpu.memory_space<vmem>>, vector<1x8x512xf32>
      %26 = vector.shape_cast %25 : vector<1x8x512xf32> to vector<8x512xf32>
      %27 = vector.shape_cast %24 : vector<8x512xf32> to vector<1x8x512xf32>
      tpu.vector_store %arg5[%c1_9, %c0_10, %c0_11], %27 {strides = array<i32>} : memref<2x8x512xf32, #tpu.memory_space<vmem>>, vector<1x8x512xf32>,
    } else {
    }
    return
  }
  func.func @transform_0(%arg0: i32) -> i32 {
    %c0_i32 = arith.constant 0 : i32
    %c0_i32_0 = arith.constant 0 : i32
    return %c0_i32 : i32
  }
  func.func @transform_1(%arg0: i32) -> i32 {
    %c0_i32 = arith.constant 0 : i32
    %c0_i32_0 = arith.constant 0 : i32
    return %c0_i32 : i32
  }
  func.func @transform_2(%arg0: i32) -> (i32, i32, i32) {
    %c0_i32 = arith.constant 0 : i32
    %c0_i32_0 = arith.constant 0 : i32
    %c0_i32_1 = arith.constant 0 : i32
    return %arg0, %c0_i32, %c0_i32_0 : i32, i32, i32
  }
  func.func @transform_3(%arg0: i32) -> (i32, i32, i32) {
    %c0_i32 = arith.constant 0 : i32
    %c0_i32_0 = arith.constant 0 : i32
    %c0_i32_1 = arith.constant 0 : i32
    return %arg0, %c0_i32, %c0_i32_0 : i32, i32, i32
  }
  func.func @transform_4(%arg0: i32) -> (i32, i32, i32) {
    %c0_i32 = arith.constant 0 : i32
    %c0_i32_0 = arith.constant 0 : i32
    %c0_i32_1 = arith.constant 0 : i32
    return %arg0, %c0_i32, %c0_i32_0 : i32, i32, i32
  }
}

</mosaic_0001>

<llo_original>
// kernel: mixup_forward.1
$region0: #{mixup_forward.1}
  #allocation0 [shape = 'u32[]', space=smem, size = 0x4, offset = 0x4, fixed_abs, tag = 'smem constant byte address 0x4 - core index']
  #allocation1 [shape = 'u32[144,128]{1,0:T(1,128)}', space=vmem, size = 0x12000, scoped, tag = 'internal scratch']
  %s0 = inlined_call_operand.vmem [shape: f32[4], index: 0, kind: input, shape index: {}]
  %s1 = inlined_call_operand.vmem [shape: s32[4], index: 1, kind: input, shape index: {}]
  %s2 = inlined_call_operand.vmem [shape: f32[4,8,512], index: 2, kind: input, shape index: {}]
  %s3 = inlined_call_operand.vmem [shape: f32[4,8,512], index: 3, kind: input, shape index: {}]
  %s4 = inlined_call_operand.vmem [shape: f32[4,8,512], index: 4, kind: output, shape index: {}]
  %s5 = sld [smem:[#allocation0]]
  $region73: #{mixup_forward.1} parent=0
    _
  %s7 = ssub.s32 1, %s5
  %s8 = scalar_select 0, %s7, %s5
  $region1: #{mixup_forward.1} parent=0
    #allocation2 [shape = 'u8[512]{0}', space=smem, size = 0x200, scoped, tag = 'input window, operand 0, single buffered']
    #allocation3 [shape = 's32[2]{0}', space=sflag, size = 0x8, scoped, tag = 'scoped memory for mixup_forward.1']
    #allocation4 [shape = 'u8[512]{0}', space=smem, size = 0x200, scoped, tag = 'input window, operand 1, single buffered']
    #allocation5 [shape = 's32[1]{0}', space=sflag, size = 0x4, scoped, tag = 'scoped memory for mixup_forward.1']
    %9 = vsyncpa [#allocation3], 0
    %10 = vsyncpa [#allocation5], 0
    loop: start=0, step=1, limit=4
    $region2: #{mixup_forward.1} parent=1 // loop_pre_header
      _
    $region3: #{mixup_forward.1} parent=1 // loop_header
      %s12 = sphi 0, %s16
      %p13 = scmp.ge.s32.totalorder %s12, 4
      %s20 = sphi 0, %s20
      %s22 = sphi 0, %s20
      %s23 = sphi 0, %s22
      %s37 = sphi 0, %s23
      %s41 = sphi 0, %s41
      %s43 = sphi 0, %s41
      %s44 = sphi 0, %s43
      %s58 = sphi 0, %s44
      %s64 = sphi 0, %s66
      %s67 = sphi 0, %s64
      %s68 = sphi 0, %s67
      %s84 = sphi 0, %s68
      %s90 = sphi 0, %s92
      %s93 = sphi 0, %s90
      %s94 = sphi 0, %s93
      %s110 = sphi 0, %s94
      %s116 = sphi 0, %s118
      %s119 = sphi 0, %s116
      %s120 = sphi 0, %s119
      %s136 = sphi 0, %s120
    $region4: #{mixup_forward.1} parent=1 // loop_header_branch
      %15 = sbr.rel (%p13) target = $region8
    $region5: #{mixup_forward.1} parent=1 // loop_body
      %s17 = ssub.s32 %s12, 1
      %s18 = ssub.s32 %s12, 2
      %s19 = sadd.s32 %s12, 1
      %s21 = sadd.s32 %s20, 1
      %p24 = scmp.eq.s32.totalorder %s12, 1
      %p25 = scmp.ne.s32.totalorder %s20, %s22
      %p26 = scmp.eq.s32.totalorder %s12, 0
      %p27 = por %p25, %p26
      %p28 = scmp.ne.s32.totalorder %s20, %s22
      %p29 = scmp.eq.s32.totalorder %s17, 1
      %p30 = por %p28, %p29
      %p31 = scmp.ne.s32.totalorder %s22, %s23
      %p32 = scmp.eq.s32.totalorder %s17, 0
      %p33 = por %p31, %p32
      %p34 = scmp.ne.s32.totalorder %s22, %s23
      %p35 = scmp.eq.s32.totalorder %s18, 1
      %p36 = por %p34, %p35
      %p38 = scmp.ne.s32.totalorder %s23, %s37
      %p39 = scmp.eq.s32.totalorder %s18, 0
      %p40 = por %p38, %p39
      %s42 = sadd.s32 %s41, 1
      %p45 = scmp.eq.s32.totalorder %s12, 1
      %p46 = scmp.ne.s32.totalorder %s41, %s43
      %p47 = scmp.eq.s32.totalorder %s12, 0
      %p48 = por %p46, %p47
      %p49 = scmp.ne.s32.totalorder %s41, %s43
      %p50 = scmp.eq.s32.totalorder %s17, 1
      %p51 = por %p49, %p50
      %p52 = scmp.ne.s32.totalorder %s43, %s44
      %p53 = scmp.eq.s32.totalorder %s17, 0
      %p54 = por %p52, %p53
      %p55 = scmp.ne.s32.totalorder %s43, %s44
      %p56 = scmp.eq.s32.totalorder %s18, 1
      %p57 = por %p55, %p56
      %p59 = scmp.ne.s32.totalorder %s44, %s58
      %p60 = scmp.eq.s32.totalorder %s18, 0
      %p61 = por %p59, %p60
      %s62 = ssub.s32 %s12, %s19
      %p63 = scmp.eq.s32.totalorder %s62, 0
      %s65 = sadd.s32 %s64, 1
      %s66 = scalar_select %p63, %s64, %s65
      %p69 = pneg %p63
      %p70 = scmp.eq.s32.totalorder %s12, 1
      %p71 = por %p69, %p70
      %p72 = scmp.ne.s32.totalorder %s64, %s67
      %p73 = scmp.eq.s32.totalorder %s12, 0
      %p74 = por %p72, %p73
      %p75 = scmp.ne.s32.totalorder %s64, %s67
      %p76 = scmp.eq.s32.totalorder %s17, 1
      %p77 = por %p75, %p76
      %p78 = scmp.ne.s32.totalorder %s67, %s68
      %p79 = scmp.eq.s32.totalorder %s17, 0
      %p80 = por %p78, %p79
      %p81 = scmp.ne.s32.totalorder %s67, %s68
      %p82 = scmp.eq.s32.totalorder %s18, 1
      %p83 = por %p81, %p82
      %p85 = scmp.ne.s32.totalorder %s68, %s84
      %p86 = scmp.eq.s32.totalorder %s18, 0
      %p87 = por %p85, %p86
      %s88 = ssub.s32 %s12, %s19
      %p89 = scmp.eq.s32.totalorder %s88, 0
      %s91 = sadd.s32 %s90, 1
      %s92 = scalar_select %p89, %s90, %s91
      %p95 = pneg %p89
      %p96 = scmp.eq.s32.totalorder %s12, 1
      %p97 = por %p95, %p96
      %p98 = scmp.ne.s32.totalorder %s90, %s93
      %p99 = scmp.eq.s32.totalorder %s12, 0
      %p100 = por %p98, %p99
      %p101 = scmp.ne.s32.totalorder %s90, %s93
      %p102 = scmp.eq.s32.totalorder %s17, 1
      %p103 = por %p101, %p102
      %p104 = scmp.ne.s32.totalorder %s93, %s94
      %p105 = scmp.eq.s32.totalorder %s17, 0
      %p106 = por %p104, %p105
      %p107 = scmp.ne.s32.totalorder %s93, %s94
      %p108 = scmp.eq.s32.totalorder %s18, 1
      %p109 = por %p107, %p108
      %p111 = scmp.ne.s32.totalorder %s94, %s110
      %p112 = scmp.eq.s32.totalorder %s18, 0
      %p113 = por %p111, %p112
      %s114 = ssub.s32 %s12, %s19
      %p115 = scmp.eq.s32.totalorder %s114, 0
      %s117 = sadd.s32 %s116, 1
      %s118 = scalar_select %p115, %s116, %s117
      %p121 = pneg %p115
      %p122 = scmp.eq.s32.totalorder %s12, 1
      %p123 = por %p121, %p122
      %p124 = scmp.ne.s32.totalorder %s116, %s119
      %p125 = scmp.eq.s32.totalorder %s12, 0
      %p126 = por %p124, %p125
      %p127 = scmp.ne.s32.totalorder %s116, %s119
      %p128 = scmp.eq.s32.totalorder %s17, 1
      %p129 = por %p127, %p128
      %p130 = scmp.ne.s32.totalorder %s119, %s120
      %p131 = scmp.eq.s32.totalorder %s17, 0
      %p132 = por %p130, %p131
      %p133 = scmp.ne.s32.totalorder %s119, %s120
      %p134 = scmp.eq.s32.totalorder %s18, 1
      %p135 = por %p133, %p134
      %p137 = scmp.ne.s32.totalorder %s120, %s136
      %p138 = scmp.eq.s32.totalorder %s18, 0
      %p139 = por %p137, %p138
      %p140 = scmp.le.s32.totalorder 1, %s12
      %p141 = scmp.lt.s32.totalorder %s12, 3
      %p142 = pnand %p140, %p141
      %p143 = pneg %p142
      // Predicated region
      $region9: #{mixup_forward.1} parent=5 // pred_check
        _
      $region10: #{mixup_forward.1} parent=5 // pred_check_branch
        %145 = sbr.rel (%p142) target = $region12
      $region11: #{mixup_forward.1} parent=5 // pred_region
        %s146 = ssub.s32 %s12, 1
        // Predicated region
        $region13: #{mixup_forward.1} parent=11 // pred_check
          %p147 = pneg %p33
        $region14: #{mixup_forward.1} parent=11 // pred_check_branch
          %149 = sbr.rel (%p147) target = $region16
        $region15: #{mixup_forward.1} parent=11 // pred_region
          %s151 = ssub.s32 16, 16
          %152 = vsyncadd [#allocation3], %s151
          %s154 = sshll.u32 %s0, 4
          %s155 = int_to_ptr.vmem [resolvable:$true] %s154
          %157 = dma.vmem_to_smem %s155, 16, [#allocation2], [#allocation3]
        $region16: #{mixup_forward.1} parent=11 // pred_fallthru
          _
        // Predicated region
        $region17: #{mixup_forward.1} parent=11 // pred_check
          %p158 = pneg %p54
        $region18: #{mixup_forward.1} parent=11 // pred_check_branch
          %160 = sbr.rel (%p158) target = $region20
        $region19: #{mixup_forward.1} parent=11 // pred_region
          %s162 = ssub.s32 16, 16
          %163 = vsyncadd [#allocation5], %s162
          %s165 = sshll.u32 %s1, 4
          %s166 = int_to_ptr.vmem [resolvable:$true] %s165
          %168 = dma.vmem_to_smem %s166, 16, [#allocation4], [#allocation5]
        $region20: #{mixup_forward.1} parent=11 // pred_fallthru
          _
      $region12: #{mixup_forward.1} parent=5 // pred_fallthru
        _
      %p169 = scmp.lt.s32.totalorder %s12, 2
      // Predicated region
      $region21: #{mixup_forward.1} parent=5 // pred_check
        %p170 = pneg %p169
      $region22: #{mixup_forward.1} parent=5 // pred_check_branch
        %172 = sbr.rel (%p170) target = $region24
      $region23: #{mixup_forward.1} parent=5 // pred_region
        // Predicated region
        $region25: #{mixup_forward.1} parent=23 // pred_check
          %p173 = pneg %p74
        $region26: #{mixup_forward.1} parent=23 // pred_check_branch
          %175 = sbr.rel (%p173) target = $region28
        $region27: #{mixup_forward.1} parent=23 // pred_region
          %s176 = smul.u32 2, %s12
          %p177 = scmp.lt.s32.totalorder %s176, 3
          %s178 = scalar_select %p177, %s176, 3
          %s179 = smul.addr %s178, 4
          %s180 = smul.addr %s179, 8
          %s181 = scalar_lea.vmem %s2, %s180
          %s182 = smul.u32 2, %s12
        $region28: #{mixup_forward.1} parent=23 // pred_fallthru
          _
        // Predicated region
        $region29: #{mixup_forward.1} parent=23 // pred_check
          %p183 = pneg %p100
        $region30: #{mixup_forward.1} parent=23 // pred_check_branch
          %185 = sbr.rel (%p183) target = $region32
        $region31: #{mixup_forward.1} parent=23 // pred_region
          %s186 = smul.u32 2, %s12
          %p187 = scmp.lt.s32.totalorder %s186, 3
          %s188 = scalar_select %p187, %s186, 3
          %s189 = smul.addr %s188, 4
          %s190 = smul.addr %s189, 8
          %s191 = scalar_lea.vmem %s3, %s190
          %s192 = smul.u32 2, %s12
        $region32: #{mixup_forward.1} parent=23 // pred_fallthru
          _
      $region24: #{mixup_forward.1} parent=5 // pred_fallthru
        _
      %p193 = scmp.le.s32.totalorder 1, %s12
      %p194 = scmp.lt.s32.totalorder %s12, 3
      %p195 = pnand %p193, %p194
      %p196 = pneg %p195
      // Predicated region
      $region33: #{mixup_forward.1} parent=5 // pred_check
        _
      $region34: #{mixup_forward.1} parent=5 // pred_check_branch
        %198 = sbr.rel (%p195) target = $region36
      $region35: #{mixup_forward.1} parent=5 // pred_region
        %s199 = ssub.s32 %s12, 1
        // Predicated region
        $region37: #{mixup_forward.1} parent=35 // pred_check
          %p200 = pneg %p33
        $region38: #{mixup_forward.1} parent=35 // pred_check_branch
          %202 = sbr.rel (%p200) target = $region40
        $region39: #{mixup_forward.1} parent=35 // pred_region
          %203 = dma.done [#allocation3], 16
        $region40: #{mixup_forward.1} parent=35 // pred_fallthru
          _
        // Predicated region
        $region41: #{mixup_forward.1} parent=35 // pred_check
          %p204 = pneg %p54
        $region42: #{mixup_forward.1} parent=35 // pred_check_branch
          %206 = sbr.rel (%p204) target = $region44
        $region43: #{mixup_forward.1} parent=35 // pred_region
          %207 = dma.done [#allocation5], 16
        $region44: #{mixup_forward.1} parent=35 // pred_fallthru
          _
        %208 = sfence
        %p209 = pneg %p33
        %p210 = pneg %p30
        %p211 = pneg %p54
        %p212 = pneg %p51
        %s213 = smul.u32 2, %s17
        %p214 = scmp.lt.s32.totalorder %s213, 3
        %s215 = scalar_select %p214, %s213, 3
        %s216 = smul.addr %s215, 4
        %s217 = smul.addr %s216, 8
        %s218 = scalar_lea.vmem %s2, %s217
        %p219 = pneg %p80
        %p220 = pneg %p77
        %s221 = smul.u32 2, %s17
        %p222 = scmp.lt.s32.totalorder %s221, 3
        %s223 = scalar_select %p222, %s221, 3
        %s224 = smul.addr %s223, 4
        %s225 = smul.addr %s224, 8
        %s226 = scalar_lea.vmem %s3, %s225
        %p227 = pneg %p106
        %p228 = pneg %p103
        %p229 = pneg %p132
        %p230 = pneg %p129
        %s231 = smul.u32 2, %s17
        %p232 = scmp.lt.s32.totalorder %s231, 3
        %s233 = scalar_select %p232, %s231, 3
        %s234 = smul.addr %s233, 4
        %s235 = smul.addr %s234, 8
        %s236 = scalar_lea.vmem %s4, %s235
        %s237 = smul.u32 2, %s17
        %p238 = scmp.lt.s32.totalorder %s237, 3
        %s239 = scalar_select %p238, %s237, 3
        %s240 = smul.addr %s239, 4
        %s241 = smul.addr %s240, 8
        %s242 = scalar_lea.vmem %s2, %s241
        %s243 = smul.u32 2, %s17
        %s244 = smul.u32 2, %s17
        %p245 = scmp.lt.s32.totalorder %s244, 3
        %s246 = scalar_select %p245, %s244, 3
        %s247 = smul.addr %s246, 4
        %s248 = smul.addr %s247, 8
        %s249 = scalar_lea.vmem %s3, %s248
        %s250 = smul.u32 2, %s17
        %s251 = smul.u32 2, %s17
        %p252 = scmp.lt.s32.totalorder %s251, 3
        %s253 = scalar_select %p252, %s251, 3
        %s254 = smul.addr %s253, 4
        %s255 = smul.addr %s254, 8
        %s256 = scalar_lea.vmem %s4, %s255
        %s257 = smul.u32 2, %s17
        %s258 = smul.u32 %s17, 2
        %s259 = sld [smem:[#allocation2 + %s258]]
        %s260 = sld [smem:[#allocation4 + %s258]]
        %p261 = scmp.ne.s32.totalorder %s260, 0
        // Predicated region
        $region45: #{mixup_forward.1} parent=35 // pred_check
          %p262 = pneg %p261
        $region46: #{mixup_forward.1} parent=35 // pred_check_branch
          %264 = sbr.rel (%p262) target = $region48
        $region47: #{mixup_forward.1} parent=35 // pred_region
          %v265 = vld [vmem:[%s249] sm:$0xff]
          %v266 = vld [vmem:[%s249 + $0x8] sm:$0xff]
          %v267 = vld [vmem:[%s249 + $0x10] sm:$0xff]
          %v268 = vld [vmem:[%s249 + $0x18] sm:$0xff]
          %v269 = vld [vmem:[%s242] sm:$0xff]
          %v270 = vld [vmem:[%s242 + $0x8] sm:$0xff]
          %v271 = vld [vmem:[%s242 + $0x10] sm:$0xff]
          %v272 = vld [vmem:[%s242 + $0x18] sm:$0xff]
          %273 = vrot.lane.b32.xlu0 %v265, 1
          %v274 = vpop.permute.xlu0 %273
          %275 = vrot.lane.b32.xlu0 %v266, 1
          %v276 = vpop.permute.xlu0 %275
          %277 = vrot.lane.b32.xlu0 %v267, 1
          %v278 = vpop.permute.xlu0 %277
          %279 = vrot.lane.b32.xlu0 %v268, 1
          %v280 = vpop.permute.xlu0 %279
          %v281 = vlaneseq
          %v282 = vand.u32 %v281, 127
          %vm283 = vcmp.lt.s32.totalorder %v282, 1
          %v284 = vsel %vm283, %v278, %v280
          %v285 = vsel %vm283, %v276, %v278
          %v286 = vsel %vm283, %v274, %v276
          %v287 = vsel %vm283, %v280, %v274
          %v288 = vrot.slane %v287, 7
          %v289 = vrot.slane %v286, 7
          %v290 = vrot.slane %v285, 7
          %v291 = vrot.slane %v284, 7
          %v292 = vadd.s32 %v282, 128
          %v293 = vadd.s32 %v282, 256
          %v294 = vadd.s32 %v282, 384
          %v295 = vlaneseq
          %v296 = vshrl.u32 %v295, 7
          %vm297 = vcmp.gt.s32.totalorder %v296, 0
          %v298 = vsel %vm297, 1, 0
          %v299 = vcvt.s32.f32 %v298
          %vm300 = vcmp.eq.s32.totalorder %v282, 0
          %vm301 = vcmp.eq.s32.totalorder %v292, 0
          %vm302 = vcmp.eq.s32.totalorder %v293, 0
          %vm303 = vcmp.eq.s32.totalorder %v294, 0
          %v304 = vmul.f32 %v288, %v299
          %v305 = vmul.f32 %v289, %v299
          %v306 = vmul.f32 %v290, %v299
          %v307 = vmul.f32 %v291, %v299
          %v308 = vsel %vm300, %v304, %v287
          %v309 = vsel %vm301, %v305, %v286
          %v310 = vsel %vm302, %v306, %v285
          %v311 = vsel %vm303, %v307, %v284
          %v312 = vmul.f32 %v308, 0.97
          %v313 = vmul.f32 %v309, 0.97
          %v314 = vmul.f32 %v310, 0.97
          %v315 = vmul.f32 %v311, 0.97
          %v316 = vsub.f32 %v265, %v312
          %v317 = vsub.f32 %v266, %v313
          %v318 = vsub.f32 %v267, %v314
          %v319 = vsub.f32 %v268, %v315
          %v320 = vmax.f32 %v316, -1.0
          %v321 = vmax.f32 %v317, -1.0
          %v322 = vmax.f32 %v318, -1.0
          %v323 = vmax.f32 %v319, -1.0
          %v324 = vmin.f32 %v320, 1.0
          %v325 = vmin.f32 %v321, 1.0
          %v326 = vmin.f32 %v322, 1.0
          %v327 = vmin.f32 %v323, 1.0
          %v328 = vstv %s259
          %v329 = vmul.f32 %v328, %v269
          %v330 = vmul.f32 %v328, %v270
          %v331 = vmul.f32 %v328, %v271
          %v332 = vmul.f32 %v328, %v272
          %s333 = ssub.f32 1.0, %s259
          %v334 = vstv %s333
          %v335 = vmul.f32 %v334, %v324
          %v336 = vmul.f32 %v334, %v325
          %v337 = vmul.f32 %v334, %v326
          %v338 = vmul.f32 %v334, %v327
          %v339 = vadd.f32 %v329, %v335
          %v340 = vadd.f32 %v330, %v336
          %v341 = vadd.f32 %v331, %v337
          %v342 = vadd.f32 %v332, %v338
          %v343 = vand.u32 2147483647, %v339
          %v344 = vand.u32 2147483647, %v340
          %v345 = vand.u32 2147483647, %v341
          %v346 = vand.u32 2147483647, %v342
          %v347 = vmax.f32 %v343, %v344
          %v348 = vmax.f32 %v345, %v346
          %v349 = vmax.f32 %v347, %v348
          %350 = vmax.xlane.f32.xlu0 %v349
          %v351 = vpop.xlane.xlu0 %350
          %v352 = vrot.slane %v351, 4
          %v353 = vmax.f32 %v351, %v352
          %v354 = vrot.slane %v353, 2
          %v355 = vmax.f32 %v353, %v354
          %v356 = vrot.slane %v355, 1
          %v357 = vmax.f32 %v355, %v356
          %v358 = vmax.f32 %v357, 1.0
          %v359 = vrcp.pop %v358
          %v360 = vmul.f32 %v339, %v359
          %v361 = vmul.f32 %v340, %v359
          %v362 = vmul.f32 %v341, %v359
          %v363 = vmul.f32 %v342, %v359
          %364 = vst [vmem:[%s256] sm:$0xff] %v360
          %365 = vst [vmem:[%s256 + $0x8] sm:$0xff] %v361
          %366 = vst [vmem:[%s256 + $0x10] sm:$0xff] %v362
          %367 = vst [vmem:[%s256 + $0x18] sm:$0xff] %v363
        $region48: #{mixup_forward.1} parent=35 // pred_fallthru
          _
        %p368 = scmp.eq.s32.totalorder %s260, 0
        // Predicated region
        $region49: #{mixup_forward.1} parent=35 // pred_check
          %p369 = pneg %p368
        $region50: #{mixup_forward.1} parent=35 // pred_check_branch
          %371 = sbr.rel (%p369) target = $region52
        $region51: #{mixup_forward.1} parent=35 // pred_region
          %v372 = vld [vmem:[%s242] sm:$0xff]
          %v373 = vld [vmem:[%s242 + $0x8] sm:$0xff]
          %v374 = vld [vmem:[%s242 + $0x10] sm:$0xff]
          %v375 = vld [vmem:[%s242 + $0x18] sm:$0xff]
          %376 = vst [vmem:[%s256] sm:$0xff] %v372
          %377 = vst [vmem:[%s256 + $0x8] sm:$0xff] %v373
          %378 = vst [vmem:[%s256 + $0x10] sm:$0xff] %v374
          %379 = vst [vmem:[%s256 + $0x18] sm:$0xff] %v375
        $region52: #{mixup_forward.1} parent=35 // pred_fallthru
          _
        %s380 = sadd.s32 %s258, 1
        %s381 = sld [smem:[#allocation2 + %s380]]
        %s382 = sld [smem:[#allocation4 + %s380]]
        %p383 = scmp.ne.s32.totalorder %s382, 0
        // Predicated region
        $region53: #{mixup_forward.1} parent=35 // pred_check
          %p384 = pneg %p383
        $region54: #{mixup_forward.1} parent=35 // pred_check_branch
          %386 = sbr.rel (%p384) target = $region56
        $region55: #{mixup_forward.1} parent=35 // pred_region
          %s387 = scalar_lea.vmem %s249, 32
          %v388 = vld [vmem:[%s387] sm:$0xff]
          %v389 = vld [vmem:[%s387 + $0x8] sm:$0xff]
          %v390 = vld [vmem:[%s387 + $0x10] sm:$0xff]
          %v391 = vld [vmem:[%s387 + $0x18] sm:$0xff]
          %s392 = scalar_lea.vmem %s242, 32
          %v393 = vld [vmem:[%s392] sm:$0xff]
          %v394 = vld [vmem:[%s392 + $0x8] sm:$0xff]
          %v395 = vld [vmem:[%s392 + $0x10] sm:$0xff]
          %v396 = vld [vmem:[%s392 + $0x18] sm:$0xff]
          %397 = vrot.lane.b32.xlu0 %v388, 1
          %v398 = vpop.permute.xlu0 %397
          %399 = vrot.lane.b32.xlu0 %v389, 1
          %v400 = vpop.permute.xlu0 %399
          %401 = vrot.lane.b32.xlu0 %v390, 1
          %v402 = vpop.permute.xlu0 %401
          %403 = vrot.lane.b32.xlu0 %v391, 1
          %v404 = vpop.permute.xlu0 %403
          %v405 = vlaneseq
          %v406 = vand.u32 %v405, 127
          %vm407 = vcmp.lt.s32.totalorder %v406, 1
          %v408 = vsel %vm407, %v402, %v404
          %v409 = vsel %vm407, %v400, %v402
          %v410 = vsel %vm407, %v398, %v400
          %v411 = vsel %vm407, %v404, %v398
          %v412 = vrot.slane %v411, 7
          %v413 = vrot.slane %v410, 7
          %v414 = vrot.slane %v409, 7
          %v415 = vrot.slane %v408, 7
          %v416 = vadd.s32 %v406, 128
          %v417 = vadd.s32 %v406, 256
          %v418 = vadd.s32 %v406, 384
          %v419 = vlaneseq
          %v420 = vshrl.u32 %v419, 7
          %vm421 = vcmp.gt.s32.totalorder %v420, 0
          %v422 = vsel %vm421, 1, 0
          %v423 = vcvt.s32.f32 %v422
          %vm424 = vcmp.eq.s32.totalorder %v406, 0
          %vm425 = vcmp.eq.s32.totalorder %v416, 0
          %vm426 = vcmp.eq.s32.totalorder %v417, 0
          %vm427 = vcmp.eq.s32.totalorder %v418, 0
          %v428 = vmul.f32 %v412, %v423
          %v429 = vmul.f32 %v413, %v423
          %v430 = vmul.f32 %v414, %v423
          %v431 = vmul.f32 %v415, %v423
          %v432 = vsel %vm424, %v428, %v411
          %v433 = vsel %vm425, %v429, %v410
          %v434 = vsel %vm426, %v430, %v409
          %v435 = vsel %vm427, %v431, %v408
          %v436 = vmul.f32 %v432, 0.97
          %v437 = vmul.f32 %v433, 0.97
          %v438 = vmul.f32 %v434, 0.97
          %v439 = vmul.f32 %v435, 0.97
          %v440 = vsub.f32 %v388, %v436
          %v441 = vsub.f32 %v389, %v437
          %v442 = vsub.f32 %v390, %v438
          %v443 = vsub.f32 %v391, %v439
          %v444 = vmax.f32 %v440, -1.0
          %v445 = vmax.f32 %v441, -1.0
          %v446 = vmax.f32 %v442, -1.0
          %v447 = vmax.f32 %v443, -1.0
          %v448 = vmin.f32 %v444, 1.0
          %v449 = vmin.f32 %v445, 1.0
          %v450 = vmin.f32 %v446, 1.0
          %v451 = vmin.f32 %v447, 1.0
          %v452 = vstv %s381
          %v453 = vmul.f32 %v452, %v393
          %v454 = vmul.f32 %v452, %v394
          %v455 = vmul.f32 %v452, %v395
          %v456 = vmul.f32 %v452, %v396
          %s457 = ssub.f32 1.0, %s381
          %v458 = vstv %s457
          %v459 = vmul.f32 %v458, %v448
          %v460 = vmul.f32 %v458, %v449
          %v461 = vmul.f32 %v458, %v450
          %v462 = vmul.f32 %v458, %v451
          %v463 = vadd.f32 %v453, %v459
          %v464 = vadd.f32 %v454, %v460
          %v465 = vadd.f32 %v455, %v461
          %v466 = vadd.f32 %v456, %v462
          %v467 = vand.u32 2147483647, %v463
          %v468 = vand.u32 2147483647, %v464
          %v469 = vand.u32 2147483647, %v465
          %v470 = vand.u32 2147483647, %v466
          %v471 = vmax.f32 %v467, %v468
          %v472 = vmax.f32 %v469, %v470
          %v473 = vmax.f32 %v471, %v472
          %474 = vmax.xlane.f32.xlu0 %v473
          %v475 = vpop.xlane.xlu0 %474
          %v476 = vrot.slane %v475, 4
          %v477 = vmax.f32 %v475, %v476
          %v478 = vrot.slane %v477, 2
          %v479 = vmax.f32 %v477, %v478
          %v480 = vrot.slane %v479, 1
          %v481 = vmax.f32 %v479, %v480
          %v482 = vmax.f32 %v481, 1.0
          %v483 = vrcp.pop %v482
          %v484 = vmul.f32 %v463, %v483
          %v485 = vmul.f32 %v464, %v483
          %v486 = vmul.f32 %v465, %v483
          %v487 = vmul.f32 %v466, %v483
          %s488 = scalar_lea.vmem %s256, 32
          %489 = vst [vmem:[%s488] sm:$0xff] %v484
          %490 = vst [vmem:[%s488 + $0x8] sm:$0xff] %v485
          %491 = vst [vmem:[%s488 + $0x10] sm:$0xff] %v486
          %492 = vst [vmem:[%s488 + $0x18] sm:$0xff] %v487
        $region56: #{mixup_forward.1} parent=35 // pred_fallthru
          _
        %p493 = scmp.eq.s32.totalorder %s382, 0
        // Predicated region
        $region57: #{mixup_forward.1} parent=35 // pred_check
          %p494 = pneg %p493
        $region58: #{mixup_forward.1} parent=35 // pred_check_branch
          %496 = sbr.rel (%p494) target = $region60
        $region59: #{mixup_forward.1} parent=35 // pred_region
          %s497 = scalar_lea.vmem %s242, 32
          %v498 = vld [vmem:[%s497] sm:$0xff]
          %v499 = vld [vmem:[%s497 + $0x8] sm:$0xff]
          %v500 = vld [vmem:[%s497 + $0x10] sm:$0xff]
          %v501 = vld [vmem:[%s497 + $0x18] sm:$0xff]
          %s502 = scalar_lea.vmem %s256, 32
          %503 = vst [vmem:[%s502] sm:$0xff] %v498
          %504 = vst [vmem:[%s502 + $0x8] sm:$0xff] %v499
          %505 = vst [vmem:[%s502 + $0x10] sm:$0xff] %v500
          %506 = vst [vmem:[%s502 + $0x18] sm:$0xff] %v501
        $region60: #{mixup_forward.1} parent=35 // pred_fallthru
          _
        %s507 = smul.u32 2, %s17
        %p508 = scmp.lt.s32.totalorder %s507, 3
        %s509 = scalar_select %p508, %s507, 3
        %s510 = smul.addr %s509, 4
        %s511 = smul.addr %s510, 8
        %s512 = scalar_lea.vmem %s4, %s511
        // Predicated region
        $region61: #{mixup_forward.1} parent=35 // pred_check
          %p513 = pneg %p129
        $region62: #{mixup_forward.1} parent=35 // pred_check_branch
          %515 = sbr.rel (%p513) target = $region64
        $region63: #{mixup_forward.1} parent=35 // pred_region
          %s516 = smul.u32 2, %s17
        $region64: #{mixup_forward.1} parent=35 // pred_fallthru
          _
      $region36: #{mixup_forward.1} parent=5 // pred_fallthru
        _
      %p517 = scmp.le.s32.totalorder 2, %s12
      // Predicated region
      $region65: #{mixup_forward.1} parent=5 // pred_check
        %p518 = pneg %p517
      $region66: #{mixup_forward.1} parent=5 // pred_check_branch
        %520 = sbr.rel (%p518) target = $region68
      $region67: #{mixup_forward.1} parent=5 // pred_region
        %s521 = ssub.s32 %s12, 2
        // Predicated region
        $region69: #{mixup_forward.1} parent=67 // pred_check
          %p522 = pneg %p135
        $region70: #{mixup_forward.1} parent=67 // pred_check_branch
          %524 = sbr.rel (%p522) target = $region72
        $region71: #{mixup_forward.1} parent=67 // pred_region
          %s525 = smul.u32 2, %s18
          %p526 = scmp.lt.s32.totalorder %s525, 3
          %s527 = scalar_select %p526, %s525, 3
          %s528 = smul.addr %s527, 4
          %s529 = smul.addr %s528, 8
          %s530 = scalar_lea.vmem %s4, %s529
        $region72: #{mixup_forward.1} parent=67 // pred_fallthru
          _
      $region68: #{mixup_forward.1} parent=5 // pred_fallthru
        _
    $region6: #{mixup_forward.1} parent=1 // loop_footer
      %s16 = sadd.s32 1, %s12
    $region7: #{mixup_forward.1} parent=1 // loop_footer_branch
      %11 = sbr.rel target = $region3
    $region8: #{mixup_forward.1} parent=1 // loop_exit
      _
    %531 = vsyncpa [#allocation3], 1
    %s532 = scalar_lea.sflag [#allocation3], 1
    %533 = vsyncpa %s532, 1
    %534 = vsyncpa [#allocation5], 1

</llo_original>
